<compile_context>
chip_gen: v6e
topology: v6e:2x2x1
jax: 0.10.0
libtpu: 0.0.40
codegen_flags: <defaults>
</compile_context>

<pallas_src>
import functools

import jax
import jax.numpy as jnp
from jax.experimental import pallas as pl
from jax.experimental.pallas import tpu as pltpu


def _round_up(x, m):
    return ((x + m - 1) // m) * m


def _pick_tk(d_pad, requested):
    """Largest multiple of 128 <= requested that divides d_pad."""
    t = min(max(128, _round_up(requested, 128)), d_pad)
    t = (t // 128) * 128
    while d_pad % t != 0:
        t -= 128
    return t


def _vmem_capacity_bytes():
    try:
        info = pltpu.get_tpu_info()
        cap = getattr(info, "vmem_capacity_bytes", None)
        if cap:
            return int(cap)
    except Exception:
        pass
    return 64 * 1024 * 1024  # conservative fallback: v7x per-core VMEM


def _moco_body(x_ref, wf_ref, bf_ref, wb_ref, bb_ref, wc_ref, bc_ref,
               out_ref, feat_ref, acc_ref):
    """Fused netF(+ReLU) -> netB -> netC with a K-tiled first matmul."""
    k = pl.program_id(1)

    @pl.when(k == 0)
    def _():
        acc_ref[...] = jnp.zeros_like(acc_ref)

    # Partial netF matmul for this K slab: acc += x_tile @ Wf_slab.
    # Wf was pre-transposed to [d_in, F] at param-prep time, so this is a plain
    # row-major contraction: contiguous Wf DMA, no in-kernel transpose.
    x_blk = x_ref[...].astype(wf_ref.dtype)
    acc_ref[...] += jnp.dot(x_blk, wf_ref[...], preferred_element_type=jnp.float32)

    @pl.when(k == pl.num_programs(1) - 1)
    def _():
        # netF bias + ReLU on the f32 accumulator (VPU-safe on v5e).
        h = jnp.maximum(acc_ref[...] + bf_ref[...], 0.0)
        if feat_ref is not None:          # projection_layer = nn.Identity() (mlp=False)
            feat_ref[...] = h.astype(feat_ref.dtype)
        # netB
        z = jnp.dot(h.astype(wb_ref.dtype), wb_ref[...],
                    preferred_element_type=jnp.float32) + bb_ref[...]
        # netC
        out_ref[...] = (jnp.dot(z.astype(wc_ref.dtype), wc_ref[...],
                                preferred_element_type=jnp.float32)
                        + bc_ref[...]).astype(out_ref.dtype)


def _moco_kernel_noproj(x_ref, wf_ref, bf_ref, wb_ref, bb_ref, wc_ref, bc_ref,
                        out_ref, acc_ref):
    _moco_body(x_ref, wf_ref, bf_ref, wb_ref, bb_ref, wc_ref, bc_ref,
               out_ref, None, acc_ref)


def _moco_kernel_proj(x_ref, wf_ref, bf_ref, wb_ref, bb_ref, wc_ref, bc_ref,
                      out_ref, feat_ref, acc_ref):
    _moco_body(x_ref, wf_ref, bf_ref, wb_ref, bb_ref, wc_ref, bc_ref,
               out_ref, feat_ref, acc_ref)


def prepare_params(params, d_in, *, tk=512, weight_dtype=jnp.float32):
    """One-time packing (hoisted out of the forward path).

    Pads all dims to (8,128)-aligned blocks and pre-transposes weights from the
    PyTorch [out, in] layout to [in, out], so the kernel does plain x @ W and the
    streamed Wf K-slabs are contiguous HBM DMAs.  Optionally stores the weights in
    bf16 (MXU-native on v5e/v6e/v7x), halving the dominant Wf HBM stream.
    """
    wf, bf = params["netF_w"], params["netF_b"]   # [F, d_in], [F]
    wb, bb = params["netB_w"], params["netB_b"]   # [B, F],    [B]
    wc, bc = params["netC_w"], params["netC_b"]   # [C, B],    [C]
    f_dim, b_dim, n_cls = wf.shape[0], wb.shape[0], wc.shape[0]

    tk = max(128, _round_up(min(tk, _round_up(d_in, 128)), 128))
    d_pad = _round_up(d_in, tk)
    f_pad = _round_up(f_dim, 128)
    b_pad = _round_up(b_dim, 128)
    c_pad = _round_up(n_cls, 128)

    # Zero padding keeps the sliced-out results exact through ReLU and later matmuls.
    return {
        "wf": jnp.pad(wf.T, ((0, d_pad - d_in), (0, f_pad - f_dim))).astype(weight_dtype),
        "bf": jnp.pad(bf, (0, f_pad - f_dim)).reshape(1, f_pad).astype(jnp.float32),
        "wb": jnp.pad(wb.T, ((0, f_pad - f_dim), (0, b_pad - b_dim))).astype(weight_dtype),
        "bb": jnp.pad(bb, (0, b_pad - b_dim)).reshape(1, b_pad).astype(jnp.float32),
        "wc": jnp.pad(wc.T, ((0, b_pad - b_dim), (0, c_pad - n_cls))).astype(weight_dtype),
        "bc": jnp.pad(bc, (0, c_pad - n_cls)).reshape(1, c_pad).astype(jnp.float32),
    }


@functools.partial(jax.jit, static_argnames=("f_dim", "n_cls", "proj", "tm", "tk"))
def moco_forward(img, prepared, *, f_dim, n_cls, proj=False, tm=256, tk=512):
    """MoCo.forward: img [N, C, H, W] f32; prepared = prepare_params(...)."""
    n = img.shape[0]
    d_in = 1
    for s in img.shape[1:]:
        d_in *= s
    x = img.reshape(n, d_in)                      # glue: nn.Flatten (NCHW -> [N, C*H*W])

    wf, bf, wb, bb, wc, bc = (prepared[k] for k in ("wf", "bf", "wb", "bb", "wc", "bc"))
    d_pad, f_pad = wf.shape
    b_pad = wb.shape[1]
    c_pad = wc.shape[1]
    assert d_pad >= d_in, "prepare_params was packed for a smaller input dim"

    # --- Tile sizes ----------------------------------------------------------
    tk = _pick_tk(d_pad, tk)
    tm = max(8, min(_round_up(tm, 8), _round_up(n, 8)))
    n_pad = _round_up(n, tm)
    num_m = n_pad // tm
    # Megacore (v7x has 2 TCs sharing the "parallel" axis): if the whole batch fits
    # one tile, split it in two so both cores get work; otherwise keep tm large so
    # the dominant Wf stream is re-fetched as few times as possible (HBM-bound).
    if num_m == 1 and n_pad >= 16:
        tm = _round_up((n_pad + 1) // 2, 8)
        n_pad = _round_up(n, tm)
        num_m = n_pad // tm
    num_k = d_pad // tk

    # Pad the activations only when actually misaligned (zero pads -> exact results).
    if n_pad != n or d_pad != d_in:
        x = jnp.pad(x, ((0, n_pad - n), (0, d_pad - d_in)))

    in_specs = [
        pl.BlockSpec((tm, tk), lambda i, k: (i, k)),        # x tile (streamed)
        pl.BlockSpec((tk, f_pad), lambda i, k: (k, 0)),     # Wf slab (streamed over K)
        pl.BlockSpec((1, f_pad), lambda i, k: (0, 0)),      # bf (grid-invariant)
        pl.BlockSpec((f_pad, b_pad), lambda i, k: (0, 0)),  # Wb (grid-invariant)
        pl.BlockSpec((1, b_pad), lambda i, k: (0, 0)),      # bb
        pl.BlockSpec((b_pad, c_pad), lambda i, k: (0, 0)),  # Wc (grid-invariant)
        pl.BlockSpec((1, c_pad), lambda i, k: (0, 0)),      # bc
    ]

    if proj:
        kernel = _moco_kernel_proj
        out_shape = (jax.ShapeDtypeStruct((n_pad, c_pad), jnp.float32),
                     jax.ShapeDtypeStruct((n_pad, f_pad), img.dtype))
        out_specs = [pl.BlockSpec((tm, c_pad), lambda i, k: (i, 0)),
                     pl.BlockSpec((tm, f_pad), lambda i, k: (i, 0))]
    else:
        kernel = _moco_kernel_noproj
        out_shape = jax.ShapeDtypeStruct((n_pad, c_pad), jnp.float32)
        out_specs = pl.BlockSpec((tm, c_pad), lambda i, k: (i, 0))

    # --- Scheduler hint: honest HBM traffic (Wf is streamed num_m times). -----
    wbytes = jnp.dtype(wf.dtype).itemsize
    xbytes = jnp.dtype(img.dtype).itemsize
    flops = 2 * n_pad * (d_pad * f_pad + f_pad * b_pad + b_pad * c_pad)
    bytes_accessed = (xbytes * n_pad * d_pad
                      + num_m * d_pad * f_pad * wbytes        # Wf, once per batch tile
                      + (f_pad * b_pad + b_pad * c_pad) * wbytes
                      + 4 * (f_pad + b_pad + c_pad)
                      + 4 * n_pad * c_pad
                      + (xbytes * n_pad * f_pad if proj else 0))
    cost = pl.CostEstimate(flops=int(flops), transcendentals=0,
                           bytes_accessed=int(bytes_accessed))

    # --- VMEM budget from the actual (double-buffered) block footprint. -------
    blk_in = (4 * tm * tk + wbytes * tk * f_pad               # streamed: x tile, Wf slab
              + 4 * 8 * f_pad + wbytes * f_pad * b_pad        # invariant: bf, Wb
              + 4 * 8 * b_pad + wbytes * b_pad * c_pad        # bb, Wc
              + 4 * 8 * c_pad)                                # bc
    blk_out = 4 * tm * c_pad + (xbytes * tm * f_pad if proj else 0)
    needed = 2 * (blk_in + blk_out) + 4 * tm * f_pad          # 2x buffering + f32 acc
    vmem_limit = int(min(max(2 * needed, 32 * 1024 * 1024),
                         (_vmem_capacity_bytes() * 3) // 4))

    result = pl.pallas_call(
        kernel,
        out_shape=out_shape,
        grid_spec=pltpu.PrefetchScalarGridSpec(
            num_scalar_prefetch=0,
            grid=(num_m, num_k),                # batch tiles (parallel), d_in reduction
            in_specs=in_specs,
            out_specs=out_specs,
            scratch_shapes=[pltpu.VMEM((tm, f_pad), jnp.float32)],  # netF accumulator
        ),
        compiler_params=pltpu.CompilerParams(
            dimension_semantics=("parallel", "arbitrary"),
            vmem_limit_bytes=vmem_limit),
        cost_estimate=cost,
    )(x, wf, bf, wb, bb, wc, bc)

    if proj:
        out_p, feat_p = result
        return out_p[:n, :n_cls], feat_p[:n, :f_dim]
    return result[:n, :n_cls]


def init_params(key, d_in, f_dim, b_dim, n_cls):
    ks = jax.random.split(key, 6)
    scale = 0.02
    return {
        "netF_w": scale * jax.random.normal(ks[0], (f_dim, d_in), jnp.float32),
        "netF_b": scale * jax.random.normal(ks[1], (f_dim,), jnp.float32),
        "netB_w": scale * jax.random.normal(ks[2], (b_dim, f_dim), jnp.float32),
        "netB_b": scale * jax.random.normal(ks[3], (b_dim,), jnp.float32),
        "netC_w": scale * jax.random.normal(ks[4], (n_cls, b_dim), jnp.float32),
        "netC_b": scale * jax.random.normal(ks[5], (n_cls,), jnp.float32),
    }


def _reference_forward(img, params):
    n = img.shape[0]
    x = img.reshape(n, -1)
    h = jnp.maximum(x @ params["netF_w"].T + params["netF_b"], 0.0)
    z = h @ params["netB_w"].T + params["netB_b"]
    return h, z @ params["netC_w"].T + params["netC_b"]


if __name__ == "__main__":
    # Small, deterministic shapes; the batch-parallel and K-reduction grid axes
    # are both exercised (2x2 and 4x2 grids below).
    N, C, H, W = 32, 4, 16, 16
    F_DIM, B_DIM, N_CLS = 32, 32, 16
    D_IN = C * H * W

    key = jax.random.PRNGKey(0)
    k_img, k_par = jax.random.split(key)
    img = jax.random.normal(k_img, (N, C, H, W), jnp.float32)
    params = init_params(k_par, D_IN, F_DIM, B_DIM, N_CLS)

    ref_h, ref_out = _reference_forward(img, params)

    # One-time packing (hoisted out of the forward path): pad + pre-transpose weights.
    prep = prepare_params(params, D_IN, tk=512, weight_dtype=jnp.float32)

    # proj=False path (no feat write stream). Default tm clamps to the batch and then
    # splits it into 2 tiles -> grid (2, 2), both v7x cores busy, exact f32 math.
    out = moco_forward(img, prep, f_dim=F_DIM, n_cls=N_CLS, proj=False)
    out = jax.block_until_ready(out)
    assert out.shape == (N, N_CLS)
    assert jnp.allclose(out, ref_out, atol=1e-4, rtol=1e-4)

    # proj=True path (feat = Identity(h) = h); tm=8 exercises a 4x2 grid.
    out2, feat = moco_forward(img, prep, f_dim=F_DIM, n_cls=N_CLS, proj=True, tm=8)
    out2, feat = jax.block_until_ready((out2, feat))
    assert out2.shape == (N, N_CLS) and feat.shape == (N, F_DIM)
    assert jnp.allclose(out2, ref_out, atol=1e-4, rtol=1e-4)
    assert jnp.allclose(feat, ref_h, atol=1e-4, rtol=1e-4)

    # bf16-weight path: halves the dominant Wf HBM stream and feeds the MXU its
    # native dtype on v5e/v6e/v7x; checked at a bf16-appropriate tolerance.
    prep_bf16 = prepare_params(params, D_IN, tk=512, weight_dtype=jnp.bfloat16)
    out_bf = moco_forward(img, prep_bf16, f_dim=F_DIM, n_cls=N_CLS, proj=False)
    out_bf = jax.block_until_ready(out_bf)
    assert out_bf.shape == (N, N_CLS)
    assert jnp.allclose(out_bf, ref_out, atol=5e-2, rtol=5e-2)

    # TODO(synk): MoCo.moco_forward (momentum key-encoder update, batch shuffle,
    # queue dequeue/enqueue) is training-only buffer mutation, not Module.forward.
    print("KERNEL_OK")
</pallas_src>

<mosaic_0001>
module attributes {stable_mosaic.version = 11 : i64} {
  func.func @_moco_kernel_noproj(%arg0: i32, %arg1: i32, %arg2: memref<16x512xf32, #tpu.memory_space<vmem>>, %arg3: memref<512x128xf32, #tpu.memory_space<vmem>>, %arg4: memref<1x128xf32, #tpu.memory_space<vmem>>, %arg5: memref<128x128xf32, #tpu.memory_space<vmem>>, %arg6: memref<1x128xf32, #tpu.memory_space<vmem>>, %arg7: memref<128x128xf32, #tpu.memory_space<vmem>>, %arg8: memref<1x128xf32, #tpu.memory_space<vmem>>, %arg9: memref<16x128xf32, #tpu.memory_space<vmem>>, %arg10: memref<16x128xf32, #tpu.memory_space<vmem>>) attributes {dimension_semantics = [#tpu.dimension_semantics<parallel>, #tpu.dimension_semantics<arbitrary>], iteration_bounds = array<i64: 2, 2>, scalar_prefetch = 0 : i64, scratch_operands = 1 : i64, tpu.core_type = #tpu.core_type<tc>, window_params = [{transform_indices = @transform_0, window_bounds = array<i64: 16, 512>}, {transform_indices = @transform_1, window_bounds = array<i64: 512, 128>}, {pipeline_mode = #tpu.pipeline_mode<synchronous>, transform_indices = @transform_2, window_bounds = array<i64: 1, 128>}, {pipeline_mode = #tpu.pipeline_mode<synchronous>, transform_indices = @transform_3, window_bounds = array<i64: 128, 128>}, {pipeline_mode = #tpu.pipeline_mode<synchronous>, transform_indices = @transform_4, window_bounds = array<i64: 1, 128>}, {pipeline_mode = #tpu.pipeline_mode<synchronous>, transform_indices = @transform_5, window_bounds = array<i64: 128, 128>}, {pipeline_mode = #tpu.pipeline_mode<synchronous>, transform_indices = @transform_6, window_bounds = array<i64: 1, 128>}, {transform_indices = @transform_7, window_bounds = array<i64: 16, 128>}]} {
    %c0_i32 = arith.constant 0 : i32
    %0 = arith.cmpi eq, %arg1, %c0_i32 : i32
    %1 = arith.extui %0 : i1 to i32
    %c0_i32_0 = arith.constant 0 : i32
    %2 = arith.cmpi ne, %1, %c0_i32_0 : i32
    scf.if %2 {
      %cst_9 = arith.constant 0.000000e+00 : f32
      %12 = vector.broadcast %cst_9 : f32 to vector<16x128xf32>
      %c0_10 = arith.constant 0 : index
      %c0_11 = arith.constant 0 : index
      %13 = vector.load %arg10[%c0_10, %c0_11] : memref<16x128xf32, #tpu.memory_space<vmem>>, vector<16x128xf32>
      tpu.vector_store %arg10[%c0_10, %c0_11], %12 {strides = array<i32>} : memref<16x128xf32, #tpu.memory_space<vmem>>, vector<16x128xf32>,
    } else {
    }
    %c0 = arith.constant 0 : index
    %c0_1 = arith.constant 0 : index
    %3 = vector.load %arg2[%c0, %c0_1] : memref<16x512xf32, #tpu.memory_space<vmem>>, vector<16x512xf32>
    %c0_2 = arith.constant 0 : index
    %c0_3 = arith.constant 0 : index
    %4 = vector.load %arg10[%c0_2, %c0_3] : memref<16x128xf32, #tpu.memory_space<vmem>>, vector<16x128xf32>
    %c0_4 = arith.constant 0 : index
    %c0_5 = arith.constant 0 : index
    %5 = vector.load %arg3[%c0_4, %c0_5] : memref<512x128xf32, #tpu.memory_space<vmem>>, vector<512x128xf32>
    %cst = arith.constant dense<0.000000e+00> : vector<16x128xf32>
    %6 = tpu.matmul %3, %5, %cst {dimension_numbers = #tpu.dot_dimension_numbers<[1], [0], [0], [1], [0, 0, 1, 1], [], []>} : vector<16x512xf32>, vector<512x128xf32>, vector<16x128xf32> -> vector<16x128xf32>
    %7 = arith.addf %4, %6 : vector<16x128xf32>
    %c0_6 = arith.constant 0 : index
    %c0_7 = arith.constant 0 : index
    %8 = vector.load %arg10[%c0_6, %c0_7] : memref<16x128xf32, #tpu.memory_space<vmem>>, vector<16x128xf32>
    tpu.vector_store %arg10[%c0_6, %c0_7], %7 {strides = array<i32>} : memref<16x128xf32, #tpu.memory_space<vmem>>, vector<16x128xf32>,
    %c1_i32 = arith.constant 1 : i32
    %9 = arith.cmpi eq, %arg1, %c1_i32 : i32
    %10 = arith.extui %9 : i1 to i32
    %c0_i32_8 = arith.constant 0 : i32
    %11 = arith.cmpi ne, %10, %c0_i32_8 : i32
    scf.if %11 {
      %c0_9 = arith.constant 0 : index
      %c0_10 = arith.constant 0 : index
      %12 = vector.load %arg10[%c0_9, %c0_10] : memref<16x128xf32, #tpu.memory_space<vmem>>, vector<16x128xf32>
      %c0_11 = arith.constant 0 : index
      %c0_12 = arith.constant 0 : index
      %13 = vector.load %arg4[%c0_11, %c0_12] : memref<1x128xf32, #tpu.memory_space<vmem>>, vector<1x128xf32>
      %14 = vector.broadcast %13 : vector<1x128xf32> to vector<16x128xf32>
      %15 = arith.addf %12, %14 : vector<16x128xf32>
      %cst_13 = arith.constant 0.000000e+00 : f32
      %16 = vector.broadcast %cst_13 : f32 to vector<16x128xf32>
      %17 = arith.maximumf %15, %16 : vector<16x128xf32>
      %c0_14 = arith.constant 0 : index
      %c0_15 = arith.constant 0 : index
      %18 = vector.load %arg5[%c0_14, %c0_15] : memref<128x128xf32, #tpu.memory_space<vmem>>, vector<128x128xf32>
      %cst_16 = arith.constant dense<0.000000e+00> : vector<16x128xf32>
      %19 = tpu.matmul %17, %18, %cst_16 {dimension_numbers = #tpu.dot_dimension_numbers<[1], [0], [0], [1], [0, 0, 1, 1], [], []>} : vector<16x128xf32>, vector<128x128xf32>, vector<16x128xf32> -> vector<16x128xf32>
      %c0_17 = arith.constant 0 : index
      %c0_18 = arith.constant 0 : index
      %20 = vector.load %arg6[%c0_17, %c0_18] : memref<1x128xf32, #tpu.memory_space<vmem>>, vector<1x128xf32>
      %21 = vector.broadcast %20 : vector<1x128xf32> to vector<16x128xf32>
      %22 = arith.addf %19, %21 : vector<16x128xf32>
      %c0_19 = arith.constant 0 : index
      %c0_20 = arith.constant 0 : index
      %23 = vector.load %arg7[%c0_19, %c0_20] : memref<128x128xf32, #tpu.memory_space<vmem>>, vector<128x128xf32>
      %cst_21 = arith.constant dense<0.000000e+00> : vector<16x128xf32>
      %24 = tpu.matmul %22, %23, %cst_21 {dimension_numbers = #tpu.dot_dimension_numbers<[1], [0], [0], [1], [0, 0, 1, 1], [], []>} : vector<16x128xf32>, vector<128x128xf32>, vector<16x128xf32> -> vector<16x128xf32>
      %c0_22 = arith.constant 0 : index
      %c0_23 = arith.constant 0 : index
      %25 = vector.load %arg8[%c0_22, %c0_23] : memref<1x128xf32, #tpu.memory_space<vmem>>, vector<1x128xf32>
      %26 = vector.broadcast %25 : vector<1x128xf32> to vector<16x128xf32>
      %27 = arith.addf %24, %26 : vector<16x128xf32>
      %c0_24 = arith.constant 0 : index
      %c0_25 = arith.constant 0 : index
      %28 = vector.load %arg9[%c0_24, %c0_25] : memref<16x128xf32, #tpu.memory_space<vmem>>, vector<16x128xf32>
      tpu.vector_store %arg9[%c0_24, %c0_25], %27 {strides = array<i32>} : memref<16x128xf32, #tpu.memory_space<vmem>>, vector<16x128xf32>,
    } else {
    }
    return
  }
  func.func @transform_0(%arg0: i32, %arg1: i32) -> (i32, i32) {
    %c0_i32 = arith.constant 0 : i32
    return %arg0, %arg1 : i32, i32
  }
  func.func @transform_1(%arg0: i32, %arg1: i32) -> (i32, i32) {
    %c0_i32 = arith.constant 0 : i32
    %c0_i32_0 = arith.constant 0 : i32
    return %arg1, %c0_i32 : i32, i32
  }
  func.func @transform_2(%arg0: i32, %arg1: i32) -> (i32, i32) {
    %c0_i32 = arith.constant 0 : i32
    %c0_i32_0 = arith.constant 0 : i32
    %c0_i32_1 = arith.constant 0 : i32
    return %c0_i32, %c0_i32_0 : i32, i32
  }
  func.func @transform_3(%arg0: i32, %arg1: i32) -> (i32, i32) {
    %c0_i32 = arith.constant 0 : i32
    %c0_i32_0 = arith.constant 0 : i32
    %c0_i32_1 = arith.constant 0 : i32
    return %c0_i32, %c0_i32_0 : i32, i32
  }
  func.func @transform_4(%arg0: i32, %arg1: i32) -> (i32, i32) {
    %c0_i32 = arith.constant 0 : i32
    %c0_i32_0 = arith.constant 0 : i32
    %c0_i32_1 = arith.constant 0 : i32
    return %c0_i32, %c0_i32_0 : i32, i32
  }
  func.func @transform_5(%arg0: i32, %arg1: i32) -> (i32, i32) {
    %c0_i32 = arith.constant 0 : i32
    %c0_i32_0 = arith.constant 0 : i32
    %c0_i32_1 = arith.constant 0 : i32
    return %c0_i32, %c0_i32_0 : i32, i32
  }
  func.func @transform_6(%arg0: i32, %arg1: i32) -> (i32, i32) {
    %c0_i32 = arith.constant 0 : i32
    %c0_i32_0 = arith.constant 0 : i32
    %c0_i32_1 = arith.constant 0 : i32
    return %c0_i32, %c0_i32_0 : i32, i32
  }
  func.func @transform_7(%arg0: i32, %arg1: i32) -> (i32, i32) {
    %c0_i32 = arith.constant 0 : i32
    %c0_i32_0 = arith.constant 0 : i32
    return %arg0, %c0_i32 : i32, i32
  }
}

</mosaic_0001>

<llo_original>
// kernel: moco_forward.1
$region0: #{moco_forward.1}
  #allocation0 [shape = 'u32[]', space=smem, size = 0x4, offset = 0x4, fixed_abs, tag = 'smem constant byte address 0x4 - core index']
  #allocation1 [shape = 'u32[144,128]{1,0:T(1,128)}', space=vmem, size = 0x12000, scoped, tag = 'internal scratch']
  #allocation2 [shape = 'f32[16,128]{1,0:T(8,128)}', space=vmem, size = 0x2000, scoped, tag = 'scratch operand']
  %s0 = inlined_call_operand.vmem [shape: f32[32,1024], index: 0, kind: input, shape index: {}]
  %s1 = inlined_call_operand.vmem [shape: f32[1024,128], index: 1, kind: input, shape index: {}]
  %s2 = inlined_call_operand.vmem [shape: f32[1,128], index: 2, kind: input, shape index: {}]
  %s3 = inlined_call_operand.vmem [shape: f32[128,128], index: 3, kind: input, shape index: {}]
  %s4 = inlined_call_operand.vmem [shape: f32[1,128], index: 4, kind: input, shape index: {}]
  %s5 = inlined_call_operand.vmem [shape: f32[128,128], index: 5, kind: input, shape index: {}]
  %s6 = inlined_call_operand.vmem [shape: f32[1,128], index: 6, kind: input, shape index: {}]
  %s7 = inlined_call_operand.vmem [shape: f32[32,128], index: 7, kind: output, shape index: {}]
  %s8 = sld [smem:[#allocation0]]
  $region92: #{moco_forward.1} parent=0
    _
  %s10 = ssub.s32 1, %s8
  %s11 = scalar_select 0, %s10, %s8
  $region1: #{moco_forward.1} parent=0
    #allocation3 [shape = 'u8[65536]{0}', space=vmem, size = 0x10000, scoped, tag = 'input window, operand 0']
    loop: start=0, step=1, limit=6
    $region2: #{moco_forward.1} parent=1 // loop_pre_header
      _
    $region3: #{moco_forward.1} parent=1 // loop_header
      %s13 = sphi 0, %s17
      %p14 = scmp.ge.s32.totalorder %s13, 6
      %s20 = sphi 0, %s32
      %s21 = sphi 0, %s28
      %s22 = sphi 0, %s20
      %s23 = sphi 0, %s21
      %s24 = sphi 0, %s22
      %s25 = sphi 0, %s23
      %s37 = sphi 0, %s39
      %s40 = sphi 0, %s37
      %s41 = sphi 0, %s40
      %s57 = sphi 0, %s41
      %s63 = sphi 0, %s65
      %s66 = sphi 0, %s63
      %s67 = sphi 0, %s66
      %s83 = sphi 0, %s67
      %s87 = sphi 0, %s87
      %s89 = sphi 0, %s87
      %s90 = sphi 0, %s89
      %s104 = sphi 0, %s90
      %s108 = sphi 0, %s108
      %s110 = sphi 0, %s108
      %s111 = sphi 0, %s110
      %s125 = sphi 0, %s111
      %s129 = sphi 0, %s129
      %s131 = sphi 0, %s129
      %s132 = sphi 0, %s131
      %s146 = sphi 0, %s132
      %s150 = sphi 0, %s150
      %s152 = sphi 0, %s150
      %s153 = sphi 0, %s152
      %s167 = sphi 0, %s153
      %s171 = sphi 0, %s171
      %s173 = sphi 0, %s171
      %s174 = sphi 0, %s173
      %s188 = sphi 0, %s174
      %s194 = sphi 0, %s196
      %s197 = sphi 0, %s194
      %s198 = sphi 0, %s197
      %s214 = sphi 0, %s198
    $region4: #{moco_forward.1} parent=1 // loop_header_branch
      %16 = sbr.rel (%p14) target = $region8
    $region5: #{moco_forward.1} parent=1 // loop_body
      %s18 = ssub.s32 %s13, 1
      %s19 = ssub.s32 %s13, 2
      %s26 = sadd.s32 1, %s21
      %p27 = scmp.ge.s32.totalorder %s26, 2
      %s28 = scalar_select %p27, 0, %s26
      %s29 = sadd.s32 1, %s20
      %s30 = scalar_select %p27, %s29, %s20
      %p31 = scmp.ge.s32.totalorder %s30, 2
      %s32 = scalar_select %p31, 0, %s30
      %s33 = ssub.s32 %s20, %s32
      %s34 = ssub.s32 %s21, %s28
      %s35 = sor.u32 %s33, %s34
      %p36 = scmp.eq.s32.totalorder %s35, 0
      %s38 = sadd.s32 %s37, 1
      %s39 = scalar_select %p36, %s37, %s38
      %p42 = pneg %p36
      %p43 = scmp.eq.s32.totalorder %s13, 3
      %p44 = por %p42, %p43
      %p45 = scmp.ne.s32.totalorder %s37, %s40
      %p46 = scmp.eq.s32.totalorder %s13, 0
      %p47 = por %p45, %p46
      %p48 = scmp.ne.s32.totalorder %s37, %s40
      %p49 = scmp.eq.s32.totalorder %s18, 3
      %p50 = por %p48, %p49
      %p51 = scmp.ne.s32.totalorder %s40, %s41
      %p52 = scmp.eq.s32.totalorder %s18, 0
      %p53 = por %p51, %p52
      %p54 = scmp.ne.s32.totalorder %s40, %s41
      %p55 = scmp.eq.s32.totalorder %s19, 3
      %p56 = por %p54, %p55
      %p58 = scmp.ne.s32.totalorder %s41, %s57
      %p59 = scmp.eq.s32.totalorder %s19, 0
      %p60 = por %p58, %p59
      %s61 = ssub.s32 %s21, %s28
      %p62 = scmp.eq.s32.totalorder %s61, 0
      %s64 = sadd.s32 %s63, 1
      %s65 = scalar_select %p62, %s63, %s64
      %p68 = pneg %p62
      %p69 = scmp.eq.s32.totalorder %s13, 3
      %p70 = por %p68, %p69
      %p71 = scmp.ne.s32.totalorder %s63, %s66
      %p72 = scmp.eq.s32.totalorder %s13, 0
      %p73 = por %p71, %p72
      %p74 = scmp.ne.s32.totalorder %s63, %s66
      %p75 = scmp.eq.s32.totalorder %s18, 3
      %p76 = por %p74, %p75
      %p77 = scmp.ne.s32.totalorder %s66, %s67
      %p78 = scmp.eq.s32.totalorder %s18, 0
      %p79 = por %p77, %p78
      %p80 = scmp.ne.s32.totalorder %s66, %s67
      %p81 = scmp.eq.s32.totalorder %s19, 3
      %p82 = por %p80, %p81
      %p84 = scmp.ne.s32.totalorder %s67, %s83
      %p85 = scmp.eq.s32.totalorder %s19, 0
      %p86 = por %p84, %p85
      %s88 = sadd.s32 %s87, 1
      %p91 = scmp.eq.s32.totalorder %s13, 3
      %p92 = scmp.ne.s32.totalorder %s87, %s89
      %p93 = scmp.eq.s32.totalorder %s13, 0
      %p94 = por %p92, %p93
      %p95 = scmp.ne.s32.totalorder %s87, %s89
      %p96 = scmp.eq.s32.totalorder %s18, 3
      %p97 = por %p95, %p96
      %p98 = scmp.ne.s32.totalorder %s89, %s90
      %p99 = scmp.eq.s32.totalorder %s18, 0
      %p100 = por %p98, %p99
      %p101 = scmp.ne.s32.totalorder %s89, %s90
      %p102 = scmp.eq.s32.totalorder %s19, 3
      %p103 = por %p101, %p102
      %p105 = scmp.ne.s32.totalorder %s90, %s104
      %p106 = scmp.eq.s32.totalorder %s19, 0
      %p107 = por %p105, %p106
      %s109 = sadd.s32 %s108, 1
      %p112 = scmp.eq.s32.totalorder %s13, 3
      %p113 = scmp.ne.s32.totalorder %s108, %s110
      %p114 = scmp.eq.s32.totalorder %s13, 0
      %p115 = por %p113, %p114
      %p116 = scmp.ne.s32.totalorder %s108, %s110
      %p117 = scmp.eq.s32.totalorder %s18, 3
      %p118 = por %p116, %p117
      %p119 = scmp.ne.s32.totalorder %s110, %s111
      %p120 = scmp.eq.s32.totalorder %s18, 0
      %p121 = por %p119, %p120
      %p122 = scmp.ne.s32.totalorder %s110, %s111
      %p123 = scmp.eq.s32.totalorder %s19, 3
      %p124 = por %p122, %p123
      %p126 = scmp.ne.s32.totalorder %s111, %s125
      %p127 = scmp.eq.s32.totalorder %s19, 0
      %p128 = por %p126, %p127
      %s130 = sadd.s32 %s129, 1
      %p133 = scmp.eq.s32.totalorder %s13, 3
      %p134 = scmp.ne.s32.totalorder %s129, %s131
      %p135 = scmp.eq.s32.totalorder %s13, 0
      %p136 = por %p134, %p135
      %p137 = scmp.ne.s32.totalorder %s129, %s131
      %p138 = scmp.eq.s32.totalorder %s18, 3
      %p139 = por %p137, %p138
      %p140 = scmp.ne.s32.totalorder %s131, %s132
      %p141 = scmp.eq.s32.totalorder %s18, 0
      %p142 = por %p140, %p141
      %p143 = scmp.ne.s32.totalorder %s131, %s132
      %p144 = scmp.eq.s32.totalorder %s19, 3
      %p145 = por %p143, %p144
      %p147 = scmp.ne.s32.totalorder %s132, %s146
      %p148 = scmp.eq.s32.totalorder %s19, 0
      %p149 = por %p147, %p148
      %s151 = sadd.s32 %s150, 1
      %p154 = scmp.eq.s32.totalorder %s13, 3
      %p155 = scmp.ne.s32.totalorder %s150, %s152
      %p156 = scmp.eq.s32.totalorder %s13, 0
      %p157 = por %p155, %p156
      %p158 = scmp.ne.s32.totalorder %s150, %s152
      %p159 = scmp.eq.s32.totalorder %s18, 3
      %p160 = por %p158, %p159
      %p161 = scmp.ne.s32.totalorder %s152, %s153
      %p162 = scmp.eq.s32.totalorder %s18, 0
      %p163 = por %p161, %p162
      %p164 = scmp.ne.s32.totalorder %s152, %s153
      %p165 = scmp.eq.s32.totalorder %s19, 3
      %p166 = por %p164, %p165
      %p168 = scmp.ne.s32.totalorder %s153, %s167
      %p169 = scmp.eq.s32.totalorder %s19, 0
      %p170 = por %p168, %p169
      %s172 = sadd.s32 %s171, 1
      %p175 = scmp.eq.s32.totalorder %s13, 3
      %p176 = scmp.ne.s32.totalorder %s171, %s173
      %p177 = scmp.eq.s32.totalorder %s13, 0
      %p178 = por %p176, %p177
      %p179 = scmp.ne.s32.totalorder %s171, %s173
      %p180 = scmp.eq.s32.totalorder %s18, 3
      %p181 = por %p179, %p180
      %p182 = scmp.ne.s32.totalorder %s173, %s174
      %p183 = scmp.eq.s32.totalorder %s18, 0
      %p184 = por %p182, %p183
      %p185 = scmp.ne.s32.totalorder %s173, %s174
      %p186 = scmp.eq.s32.totalorder %s19, 3
      %p187 = por %p185, %p186
      %p189 = scmp.ne.s32.totalorder %s174, %s188
      %p190 = scmp.eq.s32.totalorder %s19, 0
      %p191 = por %p189, %p190
      %s192 = ssub.s32 %s20, %s32
      %p193 = scmp.eq.s32.totalorder %s192, 0
      %s195 = sadd.s32 %s194, 1
      %s196 = scalar_select %p193, %s194, %s195
      %p199 = pneg %p193
      %p200 = scmp.eq.s32.totalorder %s13, 3
      %p201 = por %p199, %p200
      %p202 = scmp.ne.s32.totalorder %s194, %s197
      %p203 = scmp.eq.s32.totalorder %s13, 0
      %p204 = por %p202, %p203
      %p205 = scmp.ne.s32.totalorder %s194, %s197
      %p206 = scmp.eq.s32.totalorder %s18, 3
      %p207 = por %p205, %p206
      %p208 = scmp.ne.s32.totalorder %s197, %s198
      %p209 = scmp.eq.s32.totalorder %s18, 0
      %p210 = por %p208, %p209
      %p211 = scmp.ne.s32.totalorder %s197, %s198
      %p212 = scmp.eq.s32.totalorder %s19, 3
      %p213 = por %p211, %p212
      %p215 = scmp.ne.s32.totalorder %s198, %s214
      %p216 = scmp.eq.s32.totalorder %s19, 0
      %p217 = por %p215, %p216
      %p218 = scmp.le.s32.totalorder 1, %s13
      %p219 = scmp.lt.s32.totalorder %s13, 5
      %p220 = pnand %p218, %p219
      %p221 = pneg %p220
      // Predicated region
      $region9: #{moco_forward.1} parent=5 // pred_check
        _
      $region10: #{moco_forward.1} parent=5 // pred_check_branch
        %223 = sbr.rel (%p220) target = $region12
      $region11: #{moco_forward.1} parent=5 // pred_region
        %s224 = ssub.s32 %s13, 1
        // Predicated region
        $region13: #{moco_forward.1} parent=11 // pred_check
          %p225 = pneg %p100
        $region14: #{moco_forward.1} parent=11 // pred_check_branch
          %227 = sbr.rel (%p225) target = $region16
        $region15: #{moco_forward.1} parent=11 // pred_region
          _
        $region16: #{moco_forward.1} parent=11 // pred_fallthru
          _
        // Predicated region
        $region17: #{moco_forward.1} parent=11 // pred_check
          %p228 = pneg %p121
        $region18: #{moco_forward.1} parent=11 // pred_check_branch
          %230 = sbr.rel (%p228) target = $region20
        $region19: #{moco_forward.1} parent=11 // pred_region
          _
        $region20: #{moco_forward.1} parent=11 // pred_fallthru
          _
        // Predicated region
        $region21: #{moco_forward.1} parent=11 // pred_check
          %p231 = pneg %p142
        $region22: #{moco_forward.1} parent=11 // pred_check_branch
          %233 = sbr.rel (%p231) target = $region24
        $region23: #{moco_forward.1} parent=11 // pred_region
          _
        $region24: #{moco_forward.1} parent=11 // pred_fallthru
          _
        // Predicated region
        $region25: #{moco_forward.1} parent=11 // pred_check
          %p234 = pneg %p163
        $region26: #{moco_forward.1} parent=11 // pred_check_branch
          %236 = sbr.rel (%p234) target = $region28
        $region27: #{moco_forward.1} parent=11 // pred_region
          _
        $region28: #{moco_forward.1} parent=11 // pred_fallthru
          _
        // Predicated region
        $region29: #{moco_forward.1} parent=11 // pred_check
          %p237 = pneg %p184
        $region30: #{moco_forward.1} parent=11 // pred_check_branch
          %239 = sbr.rel (%p237) target = $region32
        $region31: #{moco_forward.1} parent=11 // pred_region
          _
        $region32: #{moco_forward.1} parent=11 // pred_fallthru
          _
      $region12: #{moco_forward.1} parent=5 // pred_fallthru
        _
      %p240 = scmp.lt.s32.totalorder %s13, 4
      // Predicated region
      $region33: #{moco_forward.1} parent=5 // pred_check
        %p241 = pneg %p240
      $region34: #{moco_forward.1} parent=5 // pred_check_branch
        %243 = sbr.rel (%p241) target = $region36
      $region35: #{moco_forward.1} parent=5 // pred_region
        // Predicated region
        $region37: #{moco_forward.1} parent=35 // pred_check
          %p244 = pneg %p47
        $region38: #{moco_forward.1} parent=35 // pred_check_branch
          %246 = sbr.rel (%p244) target = $region40
        $region39: #{moco_forward.1} parent=35 // pred_region
          %s247 = sand.u32 %s37, 1
          %s248 = sand.u32 %s37, 1
          %s249 = smul.addr %s248, 64
          %s250 = scalar_lea.vmem [#allocation3], %s249
          %s251 = smul.u32 2, %s20
          %s252 = smul.u32 4, %s21
          %s253 = smul.addr %s251, 8
          %s254 = sadd.s32 %s252, %s253
          %s255 = smul.addr %s254, 8
          %s256 = scalar_lea.vmem %s0, %s255
          // Predicated region
          $region41: #{moco_forward.1} parent=39 // pred_check
            _
          $region42: #{moco_forward.1} parent=39 // pred_check_branch
            %258 = sbr.rel (0) target = $region44
          $region43: #{moco_forward.1} parent=39 // pred_region
            // Predicated region
            $region45: #{moco_forward.1} parent=43 // pred_check
              _
            $region46: #{moco_forward.1} parent=43 // pred_check_branch
              %260 = sbr.rel (0) target = $region48
            $region47: #{moco_forward.1} parent=43 // pred_region
              loop: start=0, step=1, limit=1
              $region49: #{moco_forward.1} parent=47 // loop_pre_header
                _
              $region50: #{moco_forward.1} parent=47 // loop_header
                %s262 = sphi 0, %s266
                %p263 = scmp.ge.s32.totalorder %s262, 1
                %s267 = sphi %s256, %s256
                %s268 = sphi %s250, %s250
              $region51: #{moco_forward.1} parent=47 // loop_header_branch
                %265 = sbr.rel (%p263) target = $region55
              $region52: #{moco_forward.1} parent=47 // loop_body
                %v269 = vld [vmem:[%s267] sm:$0xff]
                %270 = vst [vmem:[%s268] sm:$0xff] %v269
                %v271 = vld [vmem:[%s267 + $0x8] sm:$0xff]
                %272 = vst [vmem:[%s268 + $0x8] sm:$0xff] %v271
                %v273 = vld [vmem:[%s267 + $0x10] sm:$0xff]
                %274 = vst [vmem:[%s268 + $0x10] sm:$0xff] %v273
                %v275 = vld [vmem:[%s267 + $0x18] sm:$0xff]
                %276 = vst [vmem:[%s268 + $0x18] sm:$0xff] %v275
                %v277 = vld [vmem:[%s267 + $0x40] sm:$0xff]
                %278 = vst [vmem:[%s268 + $0x20] sm:$0xff] %v277
                %v279 = vld [vmem:[%s267 + $0x48] sm:$0xff]
                %280 = vst [vmem:[%s268 + $0x28] sm:$0xff] %v279
                %v281 = vld [vmem:[%s267 + $0x50] sm:$0xff]
                %282 = vst [vmem:[%s268 + $0x30] sm:$0xff] %v281
                %v283 = vld [vmem:[%s267 + $0x58] sm:$0xff]
                %284 = vst [vmem:[%s268 + $0x38] sm:$0xff] %v283
              $region53: #{moco_forward.1} parent=47 // loop_footer
                %s266 = sadd.s32 1, %s262
              $region54: #{moco_forward.1} parent=47 // loop_footer_branch
                %261 = sbr.rel target = $region50
              $region55: #{moco_forward.1} parent=47 // loop_exit
                _
            $region48: #{moco_forward.1} parent=43 // pred_fallthru
              _
            // Predicated region
            $region56: #{moco_forward.1} parent=43 // pred_check
              _
            $region57: #{moco_forward.1} parent=43 // pred_check_branch
              %286 = sbr.rel target = $region59
            $region58: #{moco_forward.1} parent=43 // pred_region
              _
            $region59: #{moco_forward.1} parent=43 // pred_fallthru
              _
          $region44: #{moco_forward.1} parent=39 // pred_fallthru
            _
          %287 = vnop
        $region40: #{moco_forward.1} parent=35 // pred_fallthru
          _
        // Predicated region
        $region60: #{moco_forward.1} parent=35 // pred_check
          %p288 = pneg %p73
        $region61: #{moco_forward.1} parent=35 // pred_check_branch
          %290 = sbr.rel (%p288) target = $region63
        $region62: #{moco_forward.1} parent=35 // pred_region
          %s291 = smul.u32 64, %s21
          %p292 = scmp.lt.s32.totalorder %s291, 127
          %s293 = scalar_select %p292, %s291, 127
          %s294 = smul.addr %s293, 8
          %s295 = scalar_lea.vmem %s1, %s294
          %s296 = smul.u32 64, %s21
        $region63: #{moco_forward.1} parent=35 // pred_fallthru
          _
      $region36: #{moco_forward.1} parent=5 // pred_fallthru
        _
      %p297 = scmp.le.s32.totalorder 1, %s13
      %p298 = scmp.lt.s32.totalorder %s13, 5
      %p299 = pnand %p297, %p298
      %p300 = pneg %p299
      // Predicated region
      $region64: #{moco_forward.1} parent=5 // pred_check
        _
      $region65: #{moco_forward.1} parent=5 // pred_check_branch
        %302 = sbr.rel (%p299) target = $region67
      $region66: #{moco_forward.1} parent=5 // pred_region
        %s303 = ssub.s32 %s13, 1
        %s304 = sand.u32 %s40, 1
        %s305 = sand.u32 %s40, 1
        %s306 = smul.addr %s305, 64
        %s307 = scalar_lea.vmem [#allocation3], %s306
        // Predicated region
        $region68: #{moco_forward.1} parent=66 // pred_check
          %p308 = pneg %p53
        $region69: #{moco_forward.1} parent=66 // pred_check_branch
          %310 = sbr.rel (%p308) target = $region71
        $region70: #{moco_forward.1} parent=66 // pred_region
          _
        $region71: #{moco_forward.1} parent=66 // pred_fallthru
          _
        %s311 = sand.u32 %s40, 1
        %s312 = sand.u32 %s40, 1
        %s313 = smul.addr %s312, 64
        %s314 = scalar_lea.vmem [#allocation3], %s313
        %p315 = pneg %p53
        %p316 = pneg %p50
        %s317 = smul.u32 64, %s23
        %p318 = scmp.lt.s32.totalorder %s317, 127
        %s319 = scalar_select %p318, %s317, 127
        %s320 = smul.addr %s319, 8
        %s321 = scalar_lea.vmem %s1, %s320
        %p322 = pneg %p79
        %p323 = pneg %p76
        %p324 = pneg %p100
        %p325 = pneg %p97
        %p326 = pneg %p121
        %p327 = pneg %p118
        %p328 = pneg %p142
        %p329 = pneg %p139
        %p330 = pneg %p163
        %p331 = pneg %p160
        %p332 = pneg %p184
        %p333 = pneg %p181
        %p334 = pneg %p210
        %p335 = pneg %p207
        %s336 = smul.u32 2, %s22
        %p337 = scmp.lt.s32.totalorder %s336, 3
        %s338 = scalar_select %p337, %s336, 3
        %s339 = smul.addr %s338, 8
        %s340 = scalar_lea.vmem %s7, %s339
        %s341 = smul.u32 2, %s22
        %s342 = smul.u32 4, %s23
        %s343 = smul.u32 64, %s23
        %p344 = scmp.lt.s32.totalorder %s343, 127
        %s345 = scalar_select %p344, %s343, 127
        %s346 = smul.addr %s345, 8
        %s347 = scalar_lea.vmem %s1, %s346
        %s348 = smul.u32 64, %s23
        %s349 = smul.u32 2, %s22
        %p350 = scmp.lt.s32.totalorder %s349, 3
        %s351 = scalar_select %p350, %s349, 3
        %s352 = smul.addr %s351, 8
        %s353 = scalar_lea.vmem %s7, %s352
        %s354 = smul.u32 2, %s22
        %p355 = scmp.eq.s32.totalorder %s23, 0
        // Predicated region
        $region72: #{moco_forward.1} parent=66 // pred_check
          %p356 = pneg %p355
        $region73: #{moco_forward.1} parent=66 // pred_check_branch
          %358 = sbr.rel (%p356) target = $region75
        $region74: #{moco_forward.1} parent=66 // pred_region
          %359 = vst [vmem:[#allocation2] sm:$0xff] 0.0
          %360 = vst [vmem:[#allocation2 + $0x8] sm:$0xff] 0.0
        $region75: #{moco_forward.1} parent=66 // pred_fallthru
          _
        %v361 = vld [vmem:[%s307] sm:$0xff]
        %v362 = vld [vmem:[%s307 + $0x8] sm:$0xff]
        %v363 = vld [vmem:[%s307 + $0x10] sm:$0xff]
        %v364 = vld [vmem:[%s307 + $0x18] sm:$0xff]
        %v365 = vld [vmem:[%s307 + $0x20] sm:$0xff]
        %v366 = vld [vmem:[%s307 + $0x28] sm:$0xff]
        %v367 = vld [vmem:[%s307 + $0x30] sm:$0xff]
        %v368 = vld [vmem:[%s307 + $0x38] sm:$0xff]
        %v369 = vld [vmem:[#allocation2] sm:$0xff]
        %v370 = vld [vmem:[#allocation2 + $0x8] sm:$0xff]
        %v371 = vld [vmem:[%s347] sm:$0xff]
        %v372 = vld [vmem:[%s347 + $0x8] sm:$0xff]
        %v373 = vld [vmem:[%s347 + $0x10] sm:$0xff]
        %v374 = vld [vmem:[%s347 + $0x18] sm:$0xff]
        %v375 = vld [vmem:[%s347 + $0x20] sm:$0xff]
        %v376 = vld [vmem:[%s347 + $0x28] sm:$0xff]
        %v377 = vld [vmem:[%s347 + $0x30] sm:$0xff]
        %v378 = vld [vmem:[%s347 + $0x38] sm:$0xff]
        %v379 = vld [vmem:[%s347 + $0x40] sm:$0xff]
        %v380 = vld [vmem:[%s347 + $0x48] sm:$0xff]
        %v381 = vld [vmem:[%s347 + $0x50] sm:$0xff]
        %v382 = vld [vmem:[%s347 + $0x58] sm:$0xff]
        %v383 = vld [vmem:[%s347 + $0x60] sm:$0xff]
        %v384 = vld [vmem:[%s347 + $0x68] sm:$0xff]
        %v385 = vld [vmem:[%s347 + $0x70] sm:$0xff]
        %v386 = vld [vmem:[%s347 + $0x78] sm:$0xff]
        %v387 = vld [vmem:[%s347 + $0x80] sm:$0xff]
        %v388 = vld [vmem:[%s347 + $0x88] sm:$0xff]
        %v389 = vld [vmem:[%s347 + $0x90] sm:$0xff]
        %v390 = vld [vmem:[%s347 + $0x98] sm:$0xff]
        %v391 = vld [vmem:[%s347 + $0xa0] sm:$0xff]
        %v392 = vld [vmem:[%s347 + $0xa8] sm:$0xff]
        %v393 = vld [vmem:[%s347 + $0xb0] sm:$0xff]
        %v394 = vld [vmem:[%s347 + $0xb8] sm:$0xff]
        %v395 = vld [vmem:[%s347 + $0xc0] sm:$0xff]
        %v396 = vld [vmem:[%s347 + $0xc8] sm:$0xff]
        %v397 = vld [vmem:[%s347 + $0xd0] sm:$0xff]
        %v398 = vld [vmem:[%s347 + $0xd8] sm:$0xff]
        %v399 = vld [vmem:[%s347 + $0xe0] sm:$0xff]
        %v400 = vld [vmem:[%s347 + $0xe8] sm:$0xff]
        %v401 = vld [vmem:[%s347 + $0xf0] sm:$0xff]
        %v402 = vld [vmem:[%s347 + $0xf8] sm:$0xff]
        %v403 = vld [vmem:[%s347 + $0x100] sm:$0xff]
        %v404 = vld [vmem:[%s347 + $0x108] sm:$0xff]
        %v405 = vld [vmem:[%s347 + $0x110] sm:$0xff]
        %v406 = vld [vmem:[%s347 + $0x118] sm:$0xff]
        %v407 = vld [vmem:[%s347 + $0x120] sm:$0xff]
        %v408 = vld [vmem:[%s347 + $0x128] sm:$0xff]
        %v409 = vld [vmem:[%s347 + $0x130] sm:$0xff]
        %v410 = vld [vmem:[%s347 + $0x138] sm:$0xff]
        %v411 = vld [vmem:[%s347 + $0x140] sm:$0xff]
        %v412 = vld [vmem:[%s347 + $0x148] sm:$0xff]
        %v413 = vld [vmem:[%s347 + $0x150] sm:$0xff]
        %v414 = vld [vmem:[%s347 + $0x158] sm:$0xff]
        %v415 = vld [vmem:[%s347 + $0x160] sm:$0xff]
        %v416 = vld [vmem:[%s347 + $0x168] sm:$0xff]
        %v417 = vld [vmem:[%s347 + $0x170] sm:$0xff]
        %v418 = vld [vmem:[%s347 + $0x178] sm:$0xff]
        %v419 = vld [vmem:[%s347 + $0x180] sm:$0xff]
        %v420 = vld [vmem:[%s347 + $0x188] sm:$0xff]
        %v421 = vld [vmem:[%s347 + $0x190] sm:$0xff]
        %v422 = vld [vmem:[%s347 + $0x198] sm:$0xff]
        %v423 = vld [vmem:[%s347 + $0x1a0] sm:$0xff]
        %v424 = vld [vmem:[%s347 + $0x1a8] sm:$0xff]
        %v425 = vld [vmem:[%s347 + $0x1b0] sm:$0xff]
        %v426 = vld [vmem:[%s347 + $0x1b8] sm:$0xff]
        %v427 = vld [vmem:[%s347 + $0x1c0] sm:$0xff]
        %v428 = vld [vmem:[%s347 + $0x1c8] sm:$0xff]
        %v429 = vld [vmem:[%s347 + $0x1d0] sm:$0xff]
        %v430 = vld [vmem:[%s347 + $0x1d8] sm:$0xff]
        %v431 = vld [vmem:[%s347 + $0x1e0] sm:$0xff]
        %v432 = vld [vmem:[%s347 + $0x1e8] sm:$0xff]
        %v433 = vld [vmem:[%s347 + $0x1f0] sm:$0xff]
        %v434 = vld [vmem:[%s347 + $0x1f8] sm:$0xff]
        %435 = vmatprep.subr.mxu0 0.0
        %436 = vmatpush1.msra.mxu0 %v386
        %437 = vmatprep.subr.mxu0 0.0
        %438 = vmatpush1.msra.mxu0 %v385
        %439 = vmatprep.subr.mxu0 0.0
        %440 = vmatpush1.msra.mxu0 %v384
        %441 = vmatprep.subr.mxu0 0.0
        %442 = vmatpush1.msra.mxu0 %v383
        %443 = vmatprep.subr.mxu0 0.0
        %444 = vmatpush1.msra.mxu0 %v382
        %445 = vmatprep.subr.mxu0 0.0
        %446 = vmatpush1.msra.mxu0 %v381
        %447 = vmatprep.subr.mxu0 0.0
        %448 = vmatpush1.msra.mxu0 %v380
        %449 = vmatprep.subr.mxu0 0.0
        %450 = vmatpush1.msra.mxu0 %v379
        %451 = vmatprep.subr.mxu0 0.0
        %452 = vmatpush1.msra.mxu0 %v378
        %453 = vmatprep.subr.mxu0 0.0
        %454 = vmatpush1.msra.mxu0 %v377
        %455 = vmatprep.subr.mxu0 0.0
        %456 = vmatpush1.msra.mxu0 %v376
        %457 = vmatprep.subr.mxu0 0.0
        %458 = vmatpush1.msra.mxu0 %v375
        %459 = vmatprep.subr.mxu0 0.0
        %460 = vmatpush1.msra.mxu0 %v374
        %461 = vmatprep.subr.mxu0 0.0
        %462 = vmatpush1.msra.mxu0 %v373
        %463 = vmatprep.subr.mxu0 0.0
        %464 = vmatpush1.msra.mxu0 %v372
        %465 = vmatprep.subr.mxu0 0.0
        %466 = vmatpush1.msra.mxu0 %v371
        %467 = vmatprep.subr.mxu0 0.0
        %468 = vmatpush2.msra.mxu0 %v402
        %469 = vmatprep.subr.mxu0 0.0
        %470 = vmatpush2.msra.mxu0 %v401
        %471 = vmatprep.subr.mxu0 0.0
        %472 = vmatpush2.msra.mxu0 %v400
        %473 = vmatprep.subr.mxu0 0.0
        %474 = vmatpush2.msra.mxu0 %v399
        %475 = vmatprep.subr.mxu0 0.0
        %476 = vmatpush2.msra.mxu0 %v398
        %477 = vmatprep.subr.mxu0 0.0
        %478 = vmatpush2.msra.mxu0 %v397
        %479 = vmatprep.subr.mxu0 0.0
        %480 = vmatpush2.msra.mxu0 %v396
        %481 = vmatprep.subr.mxu0 0.0
        %482 = vmatpush2.msra.mxu0 %v395
        %483 = vmatprep.subr.mxu0 0.0
        %484 = vmatpush2.msra.mxu0 %v394
        %485 = vmatprep.subr.mxu0 0.0
        %486 = vmatpush2.msra.mxu0 %v393
        %487 = vmatprep.subr.mxu0 0.0
        %488 = vmatpush2.msra.mxu0 %v392
        %489 = vmatprep.subr.mxu0 0.0
        %490 = vmatpush2.msra.mxu0 %v391
        %491 = vmatprep.subr.mxu0 0.0
        %492 = vmatpush2.msra.mxu0 %v390
        %493 = vmatprep.subr.mxu0 0.0
        %494 = vmatpush2.msra.mxu0 %v389
        %495 = vmatprep.subr.mxu0 0.0
        %496 = vmatpush2.msra.mxu0 %v388
        %497 = vmatprep.subr.mxu0 0.0
        %498 = vmatpush2.msra.mxu0 %v387
        %499 = vmatprep.mubr.f32.mxu0 %v362
        %500 = vmatmul.mubr.f32.gmra.mxu0 %v361
        %v501 = vpop.f32.mrf.mxu0
        %v502 = vadd.f32 0.0, %v501
        %v503 = vpop.f32.mrf.mxu0
        %504 = vmatprep.mubr.f32.mxu0 %v366
        %505 = vmatmul.mubr.f32.gmra.mxu0 %v365
        %v506 = vpop.f32.mrf.mxu0
        %v507 = vadd.f32 0.0, %v506
        %v508 = vpop.f32.mrf.mxu0
        %509 = vdwg.mxu0
        %510 = vmatprep.subr.mxu0 0.0
        %511 = vmatpush1.msra.mxu0 %v418
        %512 = vmatprep.subr.mxu0 0.0
        %513 = vmatpush1.msra.mxu0 %v417
        %514 = vmatprep.subr.mxu0 0.0
        %515 = vmatpush1.msra.mxu0 %v416
        %516 = vmatprep.subr.mxu0 0.0
        %517 = vmatpush1.msra.mxu0 %v415
        %518 = vmatprep.subr.mxu0 0.0
        %519 = vmatpush1.msra.mxu0 %v414
        %520 = vmatprep.subr.mxu0 0.0
        %521 = vmatpush1.msra.mxu0 %v413
        %522 = vmatprep.subr.mxu0 0.0
        %523 = vmatpush1.msra.mxu0 %v412
        %524 = vmatprep.subr.mxu0 0.0
        %525 = vmatpush1.msra.mxu0 %v411
        %526 = vmatprep.subr.mxu0 0.0
        %527 = vmatpush1.msra.mxu0 %v410
        %528 = vmatprep.subr.mxu0 0.0
        %529 = vmatpush1.msra.mxu0 %v409
        %530 = vmatprep.subr.mxu0 0.0
        %531 = vmatpush1.msra.mxu0 %v408
        %532 = vmatprep.subr.mxu0 0.0
        %533 = vmatpush1.msra.mxu0 %v407
        %534 = vmatprep.subr.mxu0 0.0
        %535 = vmatpush1.msra.mxu0 %v406
        %536 = vmatprep.subr.mxu0 0.0
        %537 = vmatpush1.msra.mxu0 %v405
        %538 = vmatprep.subr.mxu0 0.0
        %539 = vmatpush1.msra.mxu0 %v404
        %540 = vmatprep.subr.mxu0 0.0
        %541 = vmatpush1.msra.mxu0 %v403
        %542 = vmatprep.subr.mxu0 0.0
        %543 = vmatpush2.msra.mxu0 %v434
        %544 = vmatprep.subr.mxu0 0.0
        %545 = vmatpush2.msra.mxu0 %v433
        %546 = vmatprep.subr.mxu0 0.0
        %547 = vmatpush2.msra.mxu0 %v432
        %548 = vmatprep.subr.mxu0 0.0
        %549 = vmatpush2.msra.mxu0 %v431
        %550 = vmatprep.subr.mxu0 0.0
        %551 = vmatpush2.msra.mxu0 %v430
        %552 = vmatprep.subr.mxu0 0.0
        %553 = vmatpush2.msra.mxu0 %v429
        %554 = vmatprep.subr.mxu0 0.0
        %555 = vmatpush2.msra.mxu0 %v428
        %556 = vmatprep.subr.mxu0 0.0
        %557 = vmatpush2.msra.mxu0 %v427
        %558 = vmatprep.subr.mxu0 0.0
        %559 = vmatpush2.msra.mxu0 %v426
        %560 = vmatprep.subr.mxu0 0.0
        %561 = vmatpush2.msra.mxu0 %v425
        %562 = vmatprep.subr.mxu0 0.0
        %563 = vmatpush2.msra.mxu0 %v424
        %564 = vmatprep.subr.mxu0 0.0
        %565 = vmatpush2.msra.mxu0 %v423
        %566 = vmatprep.subr.mxu0 0.0
        %567 = vmatpush2.msra.mxu0 %v422
        %568 = vmatprep.subr.mxu0 0.0
        %569 = vmatpush2.msra.mxu0 %v421
        %570 = vmatprep.subr.mxu0 0.0
        %571 = vmatpush2.msra.mxu0 %v420
        %572 = vmatprep.subr.mxu0 0.0
        %573 = vmatpush2.msra.mxu0 %v419
        %574 = vmatprep.mubr.f32.mxu0 %v364
        %575 = vmatmul.mubr.f32.gmra.mxu0 %v363
        %v576 = vpop.f32.mrf.mxu0
        %v577 = vadd.f32 %v502, %v576
        %v578 = vpop.f32.mrf.mxu0
        %579 = vmatprep.mubr.f32.mxu0 %v368
        %580 = vmatmul.mubr.f32.gmra.mxu0 %v367
        %v581 = vpop.f32.mrf.mxu0
        %v582 = vadd.f32 %v507, %v581
        %v583 = vpop.f32.mrf.mxu0
        %584 = vdwg.mxu0
        %v585 = vadd.f32 %v369, %v577
        %v586 = vadd.f32 %v370, %v582
        %587 = vst [vmem:[#allocation2] sm:$0xff] %v585
        %588 = vst [vmem:[#allocation2 + $0x8] sm:$0xff] %v586
        %p589 = scmp.eq.s32.totalorder %s23, 1
        // Predicated region
        $region76: #{moco_forward.1} parent=66 // pred_check
          %p590 = pneg %p589
        $region77: #{moco_forward.1} parent=66 // pred_check_branch
          %592 = sbr.rel (%p590) target = $region79
        $region78: #{moco_forward.1} parent=66 // pred_region
          %v593 = vld [vmem:[#allocation2] sm:$0xff]
          %v594 = vld [vmem:[#allocation2 + $0x8] sm:$0xff]
          %v595 = vld [vmem:[%s2] sm:$0x1]
          %v597 = vlaneseq
          %v598 = vshrl.u32 %v597, 7
          %v599 = vsub.s32 0, %v598
          %v600 = vrot.slane %v595, %v599
          %v602 = vadd.f32 %v593, %v600
          %v603 = vadd.f32 %v594, %v600
          %v604 = vmax.f32 %v602, 0.0
          %v605 = vmax.f32 %v603, 0.0
          %v606 = vld [vmem:[%s3] sm:$0xff]
          %v607 = vld [vmem:[%s3 + $0x8] sm:$0xff]
          %v608 = vld [vmem:[%s3 + $0x10] sm:$0xff]
          %v609 = vld [vmem:[%s3 + $0x18] sm:$0xff]
          %v610 = vld [vmem:[%s3 + $0x20] sm:$0xff]
          %v611 = vld [vmem:[%s3 + $0x28] sm:$0xff]
          %v612 = vld [vmem:[%s3 + $0x30] sm:$0xff]
          %v613 = vld [vmem:[%s3 + $0x38] sm:$0xff]
          %v614 = vld [vmem:[%s3 + $0x40] sm:$0xff]
          %v615 = vld [vmem:[%s3 + $0x48] sm:$0xff]
          %v616 = vld [vmem:[%s3 + $0x50] sm:$0xff]
          %v617 = vld [vmem:[%s3 + $0x58] sm:$0xff]
          %v618 = vld [vmem:[%s3 + $0x60] sm:$0xff]
          %v619 = vld [vmem:[%s3 + $0x68] sm:$0xff]
          %v620 = vld [vmem:[%s3 + $0x70] sm:$0xff]
          %v621 = vld [vmem:[%s3 + $0x78] sm:$0xff]
          %v622 = vld [vmem:[%s4] sm:$0x1]
          %v624 = vlaneseq
          %v625 = vshrl.u32 %v624, 7
          %v626 = vsub.s32 0, %v625
          %v627 = vrot.slane %v622, %v626
          %629 = vmatprep.subr.mxu0 0.0
          %630 = vmatpush1.msra.mxu0 %v621
          %631 = vmatprep.subr.mxu0 0.0
          %632 = vmatpush1.msra.mxu0 %v620
          %633 = vmatprep.subr.mxu0 0.0
          %634 = vmatpush1.msra.mxu0 %v619
          %635 = vmatprep.subr.mxu0 0.0
          %636 = vmatpush1.msra.mxu0 %v618
          %637 = vmatprep.subr.mxu0 0.0
          %638 = vmatpush1.msra.mxu0 %v617
          %639 = vmatprep.subr.mxu0 0.0
          %640 = vmatpush1.msra.mxu0 %v616
          %641 = vmatprep.subr.mxu0 0.0
          %642 = vmatpush1.msra.mxu0 %v615
          %643 = vmatprep.subr.mxu0 0.0
          %644 = vmatpush1.msra.mxu0 %v614
          %645 = vmatprep.subr.mxu0 0.0
          %646 = vmatpush1.msra.mxu0 %v613
          %647 = vmatprep.subr.mxu0 0.0
          %648 = vmatpush1.msra.mxu0 %v612
          %649 = vmatprep.subr.mxu0 0.0
          %650 = vmatpush1.msra.mxu0 %v611
          %651 = vmatprep.subr.mxu0 0.0
          %652 = vmatpush1.msra.mxu0 %v610
          %653 = vmatprep.subr.mxu0 0.0
          %654 = vmatpush1.msra.mxu0 %v609
          %655 = vmatprep.subr.mxu0 0.0
          %656 = vmatpush1.msra.mxu0 %v608
          %657 = vmatprep.subr.mxu0 0.0
          %658 = vmatpush1.msra.mxu0 %v607
          %659 = vmatprep.subr.mxu0 0.0
          %660 = vmatpush1.msra.mxu0 %v606
          %661 = vmatprep.subr.mxu0 0.0
          %662 = vmatpush2.msra.mxu0 0.0
          %663 = vmatprep.subr.mxu0 0.0
          %664 = vmatpush2.msra.mxu0 0.0
          %665 = vmatprep.subr.mxu0 0.0
          %666 = vmatpush2.msra.mxu0 0.0
          %667 = vmatprep.subr.mxu0 0.0
          %668 = vmatpush2.msra.mxu0 0.0
          %669 = vmatprep.subr.mxu0 0.0
          %670 = vmatpush2.msra.mxu0 0.0
          %671 = vmatprep.subr.mxu0 0.0
          %672 = vmatpush2.msra.mxu0 0.0
          %673 = vmatprep.subr.mxu0 0.0
          %674 = vmatpush2.msra.mxu0 0.0
          %675 = vmatprep.subr.mxu0 0.0
          %676 = vmatpush2.msra.mxu0 0.0
          %677 = vmatprep.subr.mxu0 0.0
          %678 = vmatpush2.msra.mxu0 0.0
          %679 = vmatprep.subr.mxu0 0.0
          %680 = vmatpush2.msra.mxu0 0.0
          %681 = vmatprep.subr.mxu0 0.0
          %682 = vmatpush2.msra.mxu0 0.0
          %683 = vmatprep.subr.mxu0 0.0
          %684 = vmatpush2.msra.mxu0 0.0
          %685 = vmatprep.subr.mxu0 0.0
          %686 = vmatpush2.msra.mxu0 0.0
          %687 = vmatprep.subr.mxu0 0.0
          %688 = vmatpush2.msra.mxu0 0.0
          %689 = vmatprep.subr.mxu0 0.0
          %690 = vmatpush2.msra.mxu0 0.0
          %691 = vmatprep.subr.mxu0 0.0
          %692 = vmatpush2.msra.mxu0 0.0
          %693 = vmatprep.mubr.f32.mxu0 0.0
          %694 = vmatmul.mubr.f32.gmra.mxu0 %v604
          %v695 = vpop.f32.mrf.mxu0
          %v696 = vadd.f32 %v627, %v695
          %v697 = vpop.f32.mrf.mxu0
          %698 = vmatprep.mubr.f32.mxu0 0.0
          %699 = vmatmul.mubr.f32.gmra.mxu0 %v605
          %v700 = vpop.f32.mrf.mxu0
          %v701 = vadd.f32 %v627, %v700
          %v702 = vpop.f32.mrf.mxu0
          %703 = vdwg.mxu0
          %v704 = vld [vmem:[%s5] sm:$0xff]
          %v705 = vld [vmem:[%s5 + $0x8] sm:$0xff]
          %v706 = vld [vmem:[%s5 + $0x10] sm:$0xff]
          %v707 = vld [vmem:[%s5 + $0x18] sm:$0xff]
          %v708 = vld [vmem:[%s5 + $0x20] sm:$0xff]
          %v709 = vld [vmem:[%s5 + $0x28] sm:$0xff]
          %v710 = vld [vmem:[%s5 + $0x30] sm:$0xff]
          %v711 = vld [vmem:[%s5 + $0x38] sm:$0xff]
          %v712 = vld [vmem:[%s5 + $0x40] sm:$0xff]
          %v713 = vld [vmem:[%s5 + $0x48] sm:$0xff]
          %v714 = vld [vmem:[%s5 + $0x50] sm:$0xff]
          %v715 = vld [vmem:[%s5 + $0x58] sm:$0xff]
          %v716 = vld [vmem:[%s5 + $0x60] sm:$0xff]
          %v717 = vld [vmem:[%s5 + $0x68] sm:$0xff]
          %v718 = vld [vmem:[%s5 + $0x70] sm:$0xff]
          %v719 = vld [vmem:[%s5 + $0x78] sm:$0xff]
          %v720 = vld [vmem:[%s6] sm:$0x1]
          %v722 = vlaneseq
          %v723 = vshrl.u32 %v722, 7
          %v724 = vsub.s32 0, %v723
          %v725 = vrot.slane %v720, %v724
          %727 = vmatprep.subr.mxu0 0.0
          %728 = vmatpush1.msra.mxu0 %v719
          %729 = vmatprep.subr.mxu0 0.0
          %730 = vmatpush1.msra.mxu0 %v718
          %731 = vmatprep.subr.mxu0 0.0
          %732 = vmatpush1.msra.mxu0 %v717
          %733 = vmatprep.subr.mxu0 0.0
          %734 = vmatpush1.msra.mxu0 %v716
          %735 = vmatprep.subr.mxu0 0.0
          %736 = vmatpush1.msra.mxu0 %v715
          %737 = vmatprep.subr.mxu0 0.0
          %738 = vmatpush1.msra.mxu0 %v714
          %739 = vmatprep.subr.mxu0 0.0
          %740 = vmatpush1.msra.mxu0 %v713
          %741 = vmatprep.subr.mxu0 0.0
          %742 = vmatpush1.msra.mxu0 %v712
          %743 = vmatprep.subr.mxu0 0.0
          %744 = vmatpush1.msra.mxu0 %v711
          %745 = vmatprep.subr.mxu0 0.0
          %746 = vmatpush1.msra.mxu0 %v710
          %747 = vmatprep.subr.mxu0 0.0
          %748 = vmatpush1.msra.mxu0 %v709
          %749 = vmatprep.subr.mxu0 0.0
          %750 = vmatpush1.msra.mxu0 %v708
          %751 = vmatprep.subr.mxu0 0.0
          %752 = vmatpush1.msra.mxu0 %v707
          %753 = vmatprep.subr.mxu0 0.0
          %754 = vmatpush1.msra.mxu0 %v706
          %755 = vmatprep.subr.mxu0 0.0
          %756 = vmatpush1.msra.mxu0 %v705
          %757 = vmatprep.subr.mxu0 0.0
          %758 = vmatpush1.msra.mxu0 %v704
          %759 = vmatprep.subr.mxu0 0.0
          %760 = vmatpush2.msra.mxu0 0.0
          %761 = vmatprep.subr.mxu0 0.0
          %762 = vmatpush2.msra.mxu0 0.0
          %763 = vmatprep.subr.mxu0 0.0
          %764 = vmatpush2.msra.mxu0 0.0
          %765 = vmatprep.subr.mxu0 0.0
          %766 = vmatpush2.msra.mxu0 0.0
          %767 = vmatprep.subr.mxu0 0.0
          %768 = vmatpush2.msra.mxu0 0.0
          %769 = vmatprep.subr.mxu0 0.0
          %770 = vmatpush2.msra.mxu0 0.0
          %771 = vmatprep.subr.mxu0 0.0
          %772 = vmatpush2.msra.mxu0 0.0
          %773 = vmatprep.subr.mxu0 0.0
          %774 = vmatpush2.msra.mxu0 0.0
          %775 = vmatprep.subr.mxu0 0.0
          %776 = vmatpush2.msra.mxu0 0.0
          %777 = vmatprep.subr.mxu0 0.0
          %778 = vmatpush2.msra.mxu0 0.0
          %779 = vmatprep.subr.mxu0 0.0
          %780 = vmatpush2.msra.mxu0 0.0
          %781 = vmatprep.subr.mxu0 0.0
          %782 = vmatpush2.msra.mxu0 0.0
          %783 = vmatprep.subr.mxu0 0.0
          %784 = vmatpush2.msra.mxu0 0.0
          %785 = vmatprep.subr.mxu0 0.0
          %786 = vmatpush2.msra.mxu0 0.0
          %787 = vmatprep.subr.mxu0 0.0
          %788 = vmatpush2.msra.mxu0 0.0
          %789 = vmatprep.subr.mxu0 0.0
          %790 = vmatpush2.msra.mxu0 0.0
          %791 = vmatprep.mubr.f32.mxu0 0.0
          %792 = vmatmul.mubr.f32.gmra.mxu0 %v696
          %v793 = vpop.f32.mrf.mxu0
          %v794 = vadd.f32 %v725, %v793
          %v795 = vpop.f32.mrf.mxu0
          %796 = vmatprep.mubr.f32.mxu0 0.0
          %797 = vmatmul.mubr.f32.gmra.mxu0 %v701
          %v798 = vpop.f32.mrf.mxu0
          %v799 = vadd.f32 %v725, %v798
          %v800 = vpop.f32.mrf.mxu0
          %801 = vdwg.mxu0
          %802 = vst [vmem:[%s353] sm:$0xff] %v794
          %803 = vst [vmem:[%s353 + $0x8] sm:$0xff] %v799
        $region79: #{moco_forward.1} parent=66 // pred_fallthru
          _
        %s804 = smul.u32 2, %s22
        %p805 = scmp.lt.s32.totalorder %s804, 3
        %s806 = scalar_select %p805, %s804, 3
        %s807 = smul.addr %s806, 8
        %s808 = scalar_lea.vmem %s7, %s807
        // Predicated region
        $region80: #{moco_forward.1} parent=66 // pred_check
          %p809 = pneg %p207
        $region81: #{moco_forward.1} parent=66 // pred_check_branch
          %811 = sbr.rel (%p809) target = $region83
        $region82: #{moco_forward.1} parent=66 // pred_region
          %s812 = smul.u32 2, %s22
        $region83: #{moco_forward.1} parent=66 // pred_fallthru
          _
      $region67: #{moco_forward.1} parent=5 // pred_fallthru
        _
      %p813 = scmp.le.s32.totalorder 2, %s13
      // Predicated region
      $region84: #{moco_forward.1} parent=5 // pred_check
        %p814 = pneg %p813
      $region85: #{moco_forward.1} parent=5 // pred_check_branch
        %816 = sbr.rel (%p814) target = $region87
      $region86: #{moco_forward.1} parent=5 // pred_region
        %s817 = ssub.s32 %s13, 2
        // Predicated region
        $region88: #{moco_forward.1} parent=86 // pred_check
          %p818 = pneg %p213
        $region89: #{moco_forward.1} parent=86 // pred_check_branch
          %820 = sbr.rel (%p818) target = $region91
        $region90: #{moco_forward.1} parent=86 // pred_region
          %s821 = smul.u32 2, %s24
          %p822 = scmp.lt.s32.totalorder %s821, 3
          %s823 = scalar_select %p822, %s821, 3
          %s824 = smul.addr %s823, 8
          %s825 = scalar_lea.vmem %s7, %s824
        $region91: #{moco_forward.1} parent=86 // pred_fallthru
          _
      $region87: #{moco_forward.1} parent=5 // pred_fallthru
        _
    $region6: #{moco_forward.1} parent=1 // loop_footer
      %s17 = sadd.s32 1, %s13
    $region7: #{moco_forward.1} parent=1 // loop_footer_branch
      %12 = sbr.rel target = $region3
    $region8: #{moco_forward.1} parent=1 // loop_exit
      _

</llo_original>
